<compile_context>
chip_gen: v5e
topology: v5e:2x2
jax: 0.10.0
libtpu: 0.0.40
codegen_flags: <defaults>
</compile_context>

<pallas_src>
import functools

import jax
import jax.numpy as jnp
from jax.experimental import pallas as pl
from jax.experimental.pallas import tpu as pltpu


_TILE_BYTES = 4 * 1024 * 1024      # target f32-equivalent bytes per streamed x tile
_VMEM_LIMIT = 48 * 1024 * 1024     # safe on v7x (64 MiB phys) and v5e/v6e (128 MiB)


def _cdiv(a, b):
    return -(-a // b)


def _round_up(a, b):
    return _cdiv(a, b) * b


# ---------------------------------------------------------------------------
# Kernels
# ---------------------------------------------------------------------------

def _reduce_kernel(x_ref, sum_ref, sq_ref, *, rows, tb, n_inner, needs_mask):
    """Accumulate per-core (1,1,lane) partial sums of x and x*x over row tiles.

    Grid is (n_par, n_inner): axis 0 "parallel" (each core owns its own
    accumulator row -> safe on v7x megacore), axis 1 "arbitrary" (sequential
    accumulation).  Ragged last tiles / overrun grid points are masked against
    the true row count, so the wrapper never pads.
    """
    c = pl.program_id(0)
    i = pl.program_id(1)

    @pl.when(i == 0)
    def _():
        sum_ref[...] = jnp.zeros_like(sum_ref)
        sq_ref[...] = jnp.zeros_like(sq_ref)

    x = x_ref[...].astype(jnp.float32)                      # (tb_blk, lane)
    if needs_mask:
        t = c * n_inner + i                                 # nominal tile index
        valid = rows - t * tb                               # valid rows (<=0 -> none)
        row_ids = jax.lax.broadcasted_iota(jnp.int32, x.shape, 0)
        x = jnp.where(row_ids < valid, x, 0.0)

    sum_ref[...] += jnp.sum(x, axis=0, keepdims=True)[None]
    sq_ref[...] += jnp.sum(x * x, axis=0, keepdims=True)[None]


def _normalize_kernel(x_ref, scale_ref, offset_ref, y_ref, *, denorm):
    """Pure-VPU hot loop: one fused sub/mul (or mul/add) per element."""
    x = x_ref[...].astype(jnp.float32)                      # (tb, lane)
    if denorm:
        y = x * scale_ref[...] + offset_ref[...]            # x*std + mean
    else:
        y = (x - offset_ref[...]) * scale_ref[...]          # (x - mean) * inv_std
        y = jnp.clip(y, -5.0, 5.0)
    y_ref[...] = y.astype(y_ref.dtype)


# ---------------------------------------------------------------------------
# Wrapper
# ---------------------------------------------------------------------------

def _choose_layout(B, F):
    """Pick a lane-dense streaming view for the (B, F) tensor.

    Returns (lane, rep, rows): stream viewed as (rows, lane); feature of lane
    j is j % F (rep = lane // F).  Only pure-reshape views are used (no pad);
    otherwise (B, F) is streamed as-is (correct; masked stores if F % 128 != 0).
    """
    if F % 128 == 0:
        return F, 1, B
    if F < 128 and 128 % F == 0 and (B * F) % 128 == 0:
        return 128, 128 // F, (B * F) // 128
    return F, 1, B


def generalized_moving_stats_forward(x, mean, sqrs, step, *, training=True,
                                     denorm=False, decay=0.99,
                                     max_val=100000.0, eps=0.0):
    """Forward pass of GeneralizedMovingStats(impl='mean_std').

    Args:
      x:    (B, F) float input.
      mean: (F,)   float32 running mean state.
      sqrs: (F,)   float32 running E[x^2] state.
      step: (1,)   int32 step counter.
    Returns:
      y, new_mean, new_sqrs, new_step
    """
    B, F = x.shape
    n = B * F
    x_dtype = x.dtype
    itemsize = jnp.dtype(x_dtype).itemsize

    mean = mean.astype(jnp.float32)
    sqrs = sqrs.astype(jnp.float32)
    step = step.astype(jnp.int32)

    lane, rep, rows = _choose_layout(B, F)

    # --- tile sizing --------------------------------------------------------
    # Byte-target sized blocks (no 512-row cap); f32-equivalent sizing keeps
    # in-kernel f32 temps bounded for narrow dtypes.  Multiple of 32 rows
    # unless a single block covers the stream (then "equal full dim" applies).
    bytes_per_row = lane * max(itemsize, 4)
    tb_cap = max(32, (_TILE_BYTES // bytes_per_row) // 32 * 32)
    tb = min(tb_cap, rows)
    if tb == rows and rows >= 64:
        # Prefer >=2 tiles so both v7x TensorCores get work on each pass.
        tb = _round_up(_cdiv(rows, 2), 32)
    n_tiles = _cdiv(rows, tb)

    # Lane-dense view of x: a pure reshape (never a pad / extra HBM pass).
    packed = not (lane == F and rows == B)
    x2 = x.reshape(rows, lane) if packed else x

    if training:
        n_par = 2 if n_tiles >= 2 else 1
        n_inner = _cdiv(n_tiles, n_par)
        needs_mask = (rows % tb != 0) or (n_par * n_inner != n_tiles)

        def x_map(c, i):
            # Clamp overrun grid points (odd n_tiles) to a valid block; the
            # kernel masks their contribution to zero.
            return (jnp.minimum(c * n_inner + i, n_tiles - 1), 0)

        sum_x, sum_xx = pl.pallas_call(
            functools.partial(_reduce_kernel, rows=rows, tb=tb,
                              n_inner=n_inner, needs_mask=needs_mask),
            out_shape=(jax.ShapeDtypeStruct((n_par, 1, lane), jnp.float32),
                       jax.ShapeDtypeStruct((n_par, 1, lane), jnp.float32)),
            grid=(n_par, n_inner),
            in_specs=[pl.BlockSpec((tb, lane), x_map)],
            out_specs=(pl.BlockSpec((1, 1, lane), lambda c, i: (c, 0, 0)),
                       pl.BlockSpec((1, 1, lane), lambda c, i: (c, 0, 0))),
            compiler_params=pltpu.CompilerParams(
                dimension_semantics=("parallel", "arbitrary"),
                vmem_limit_bytes=_VMEM_LIMIT),
            cost_estimate=pl.CostEstimate(
                flops=3 * rows * lane, transcendentals=0,
                bytes_accessed=rows * lane * itemsize),
        )(x2)

        batch_mean = jnp.sum(sum_x) / n
        batch_sqrs = jnp.sum(sum_xx) / n
        new_mean = decay * mean + (1.0 - decay) * batch_mean
        new_sqrs = decay * sqrs + (1.0 - decay) * batch_sqrs
        new_step = step + 1
    else:
        new_mean, new_sqrs, new_step = mean, sqrs, step

    # O(F) per-feature math hoisted out of the streaming pass (single exact
    # sqrt + reciprocal per feature; the hot loop is one fused op/element).
    var = new_sqrs - new_mean * new_mean
    std = jnp.sqrt(jnp.maximum(var, 1.0 / (max_val * max_val)) + eps)
    if denorm:
        scale_f, offset_f = std, new_mean          # y = x*std + mean
    else:
        scale_f, offset_f = 1.0 / std, new_mean    # y = (x - mean)*inv_std, clipped

    scale_row = jnp.tile(scale_f, rep).reshape(1, lane).astype(jnp.float32)
    offset_row = jnp.tile(offset_f, rep).reshape(1, lane).astype(jnp.float32)

    y2 = pl.pallas_call(
        functools.partial(_normalize_kernel, denorm=denorm),
        out_shape=jax.ShapeDtypeStruct((rows, lane), x_dtype),
        grid=(n_tiles,),
        in_specs=[pl.BlockSpec((tb, lane), lambda i: (i, 0)),
                  pl.BlockSpec((1, lane), lambda i: (0, 0)),
                  pl.BlockSpec((1, lane), lambda i: (0, 0))],
        out_specs=pl.BlockSpec((tb, lane), lambda i: (i, 0)),
        compiler_params=pltpu.CompilerParams(
            dimension_semantics=("parallel",),
            vmem_limit_bytes=_VMEM_LIMIT),
        cost_estimate=pl.CostEstimate(
            flops=3 * rows * lane, transcendentals=0,
            bytes_accessed=2 * rows * lane * itemsize),
    )(x2, scale_row, offset_row)

    y = y2.reshape(B, F) if packed else y2
    return y, new_mean, new_sqrs, new_step


# ---------------------------------------------------------------------------
# Pure-JAX reference (mirrors the PyTorch module) + demo / checks
# ---------------------------------------------------------------------------

def _reference_forward(x, mean, sqrs, step, *, training=True, denorm=False,
                       decay=0.99, max_val=100000.0, eps=0.0):
    x = x.astype(jnp.float32)
    if training:
        step = step + 1
        mean = decay * mean + (1.0 - decay) * jnp.mean(x)
        sqrs = decay * sqrs + (1.0 - decay) * jnp.mean(x * x)
    var = sqrs - mean ** 2
    std = jnp.sqrt(jnp.maximum(var, 1.0 / max_val ** 2) + eps)
    if denorm:
        y = x * std + mean
    else:
        y = jnp.clip((x - mean) / std, -5.0, 5.0)
    return y, mean, sqrs, step


def _check(x, mean, sqrs, step, training, denorm):
    out = generalized_moving_stats_forward(
        x, mean, sqrs, step, training=training, denorm=denorm)
    jax.block_until_ready(out)
    ref = _reference_forward(x, mean, sqrs, step, training=training, denorm=denorm)
    y, nm, ns, nstep = out
    y_r, m_r, s_r, st_r = ref
    assert jnp.allclose(y.astype(jnp.float32), y_r, atol=1e-4, rtol=1e-4)
    assert jnp.allclose(nm, m_r, atol=1e-5, rtol=1e-4)
    assert jnp.allclose(ns, s_r, atol=1e-5, rtol=1e-4)
    assert int(nstep[0]) == int(st_r[0])
    return out


if __name__ == "__main__":
    key = jax.random.PRNGKey(0)
    B, F = 2, 32   # batch=2, insize=32 (module's `insize`)

    x = jax.random.normal(key, (B, F), dtype=jnp.float32) * 3.0 + 1.5
    mean = jnp.zeros((F,), dtype=jnp.float32)
    sqrs = jnp.zeros((F,), dtype=jnp.float32)
    step = jnp.ones((1,), dtype=jnp.int32)

    # 1) Main demo: training forward, normalize path (tiny, single tile).
    y, new_mean, new_sqrs, new_step = _check(x, mean, sqrs, step,
                                             training=True, denorm=False)

    # 2) Eval forward, denorm path, using the updated state.
    _check(x, new_mean, new_sqrs, new_step, training=False, denorm=True)

    # 3) Larger batch: lane-dense 128-wide repack + dual-accumulator reduce.
    xb = jax.random.normal(jax.random.PRNGKey(1), (4096, F), jnp.float32) * 2.0 - 0.5
    _check(xb, new_mean, new_sqrs, new_step, training=True, denorm=False)

    # 4) Ragged rows (F=128 direct layout, last tile partially valid).
    mean128 = jnp.full((128,), 0.1, dtype=jnp.float32)
    sqrs128 = jnp.full((128,), 1.3, dtype=jnp.float32)
    xr = jax.random.normal(jax.random.PRNGKey(2), (1000, 128), jnp.float32) + 0.25
    _check(xr, mean128, sqrs128, step, training=True, denorm=False)

    print("KERNEL_OK")
</pallas_src>

<mosaic_0001>
module attributes {stable_mosaic.version = 11 : i64} {
  func.func @_reduce_kernel(%arg0: i32, %arg1: i32, %arg2: memref<2x32xf32, #tpu.memory_space<vmem>>, %arg3: memref<1x1x32xf32, #tpu.memory_space<vmem>>, %arg4: memref<1x1x32xf32, #tpu.memory_space<vmem>>) attributes {dimension_semantics = [#tpu.dimension_semantics<parallel>, #tpu.dimension_semantics<arbitrary>], iteration_bounds = array<i64: 1, 1>, scalar_prefetch = 0 : i64, scratch_operands = 0 : i64, tpu.core_type = #tpu.core_type<tc>, window_params = [{transform_indices = @transform_0, window_bounds = array<i64: 2, 32>}, {transform_indices = @transform_1, window_bounds = array<i64: 1, 1, 32>}, {transform_indices = @transform_2, window_bounds = array<i64: 1, 1, 32>}]} {
    %c0_i32 = arith.constant 0 : i32
    %0 = arith.cmpi eq, %arg1, %c0_i32 : i32
    %1 = arith.extui %0 : i1 to i32
    %c0_i32_0 = arith.constant 0 : i32
    %2 = arith.cmpi ne, %1, %c0_i32_0 : i32
    scf.if %2 {
      %cst_15 = arith.constant 0.000000e+00 : f32
      %17 = vector.broadcast %cst_15 : f32 to vector<1x1x32xf32>
      %c0_16 = arith.constant 0 : index
      %c0_17 = arith.constant 0 : index
      %c0_18 = arith.constant 0 : index
      %18 = vector.load %arg3[%c0_16, %c0_17, %c0_18] : memref<1x1x32xf32, #tpu.memory_space<vmem>>, vector<1x1x32xf32>
      tpu.vector_store %arg3[%c0_16, %c0_17, %c0_18], %17 {strides = array<i32>} : memref<1x1x32xf32, #tpu.memory_space<vmem>>, vector<1x1x32xf32>,
      %cst_19 = arith.constant 0.000000e+00 : f32
      %19 = vector.broadcast %cst_19 : f32 to vector<1x1x32xf32>
      %c0_20 = arith.constant 0 : index
      %c0_21 = arith.constant 0 : index
      %c0_22 = arith.constant 0 : index
      %20 = vector.load %arg4[%c0_20, %c0_21, %c0_22] : memref<1x1x32xf32, #tpu.memory_space<vmem>>, vector<1x1x32xf32>
      tpu.vector_store %arg4[%c0_20, %c0_21, %c0_22], %19 {strides = array<i32>} : memref<1x1x32xf32, #tpu.memory_space<vmem>>, vector<1x1x32xf32>,
    } else {
    }
    %c0 = arith.constant 0 : index
    %c0_1 = arith.constant 0 : index
    %3 = vector.load %arg2[%c0, %c0_1] : memref<2x32xf32, #tpu.memory_space<vmem>>, vector<2x32xf32>
    %c0_2 = arith.constant 0 : index
    %c0_3 = arith.constant 0 : index
    %c0_4 = arith.constant 0 : index
    %4 = vector.load %arg3[%c0_2, %c0_3, %c0_4] : memref<1x1x32xf32, #tpu.memory_space<vmem>>, vector<1x1x32xf32>
    %cst = arith.constant dense<0.000000e+00> : vector<32xf32>
    %5 = vector.multi_reduction <add>, %3, %cst [0] : vector<2x32xf32> to vector<32xf32>
    %6 = vector.shape_cast %5 : vector<32xf32> to vector<1x32xf32>
    %7 = vector.shape_cast %6 : vector<1x32xf32> to vector<1x1x32xf32>
    %8 = arith.addf %4, %7 : vector<1x1x32xf32>
    %c0_5 = arith.constant 0 : index
    %c0_6 = arith.constant 0 : index
    %c0_7 = arith.constant 0 : index
    %9 = vector.load %arg3[%c0_5, %c0_6, %c0_7] : memref<1x1x32xf32, #tpu.memory_space<vmem>>, vector<1x1x32xf32>
    tpu.vector_store %arg3[%c0_5, %c0_6, %c0_7], %8 {strides = array<i32>} : memref<1x1x32xf32, #tpu.memory_space<vmem>>, vector<1x1x32xf32>,
    %c0_8 = arith.constant 0 : index
    %c0_9 = arith.constant 0 : index
    %c0_10 = arith.constant 0 : index
    %10 = vector.load %arg4[%c0_8, %c0_9, %c0_10] : memref<1x1x32xf32, #tpu.memory_space<vmem>>, vector<1x1x32xf32>
    %11 = arith.mulf %3, %3 : vector<2x32xf32>
    %cst_11 = arith.constant dense<0.000000e+00> : vector<32xf32>
    %12 = vector.multi_reduction <add>, %11, %cst_11 [0] : vector<2x32xf32> to vector<32xf32>
    %13 = vector.shape_cast %12 : vector<32xf32> to vector<1x32xf32>
    %14 = vector.shape_cast %13 : vector<1x32xf32> to vector<1x1x32xf32>
    %15 = arith.addf %10, %14 : vector<1x1x32xf32>
    %c0_12 = arith.constant 0 : index
    %c0_13 = arith.constant 0 : index
    %c0_14 = arith.constant 0 : index
    %16 = vector.load %arg4[%c0_12, %c0_13, %c0_14] : memref<1x1x32xf32, #tpu.memory_space<vmem>>, vector<1x1x32xf32>
    tpu.vector_store %arg4[%c0_12, %c0_13, %c0_14], %15 {strides = array<i32>} : memref<1x1x32xf32, #tpu.memory_space<vmem>>, vector<1x1x32xf32>,
    return
  }
  func.func @transform_0(%arg0: i32, %arg1: i32) -> (i32, i32) {
    %c1_i32 = arith.constant 1 : i32
    %0 = arith.muli %arg0, %c1_i32 : i32
    %1 = arith.addi %0, %arg1 : i32
    %c0_i32 = arith.constant 0 : i32
    %2 = arith.minsi %1, %c0_i32 : i32
    %c0_i32_0 = arith.constant 0 : i32
    %c0_i32_1 = arith.constant 0 : i32
    return %2, %c0_i32_0 : i32, i32
  }
  func.func @transform_1(%arg0: i32, %arg1: i32) -> (i32, i32, i32) {
    %c0_i32 = arith.constant 0 : i32
    %c0_i32_0 = arith.constant 0 : i32
    %c0_i32_1 = arith.constant 0 : i32
    return %arg0, %c0_i32, %c0_i32_0 : i32, i32, i32
  }
  func.func @transform_2(%arg0: i32, %arg1: i32) -> (i32, i32, i32) {
    %c0_i32 = arith.constant 0 : i32
    %c0_i32_0 = arith.constant 0 : i32
    %c0_i32_1 = arith.constant 0 : i32
    return %arg0, %c0_i32, %c0_i32_0 : i32, i32, i32
  }
}

</mosaic_0001>

<llo_original>
// kernel: tpu_custom_call.1
$region0: #{tpu_custom_call.1}
  #allocation0 [shape = 'u32[]', space=smem, size = 0x4, offset = 0x4, fixed_abs, tag = 'smem constant byte address 0x4 - core index']
  #allocation1 [shape = 'u32[72,128]{1,0:T(1,128)}', space=vmem, size = 0x9000, scoped, tag = 'internal scratch']
  %s0 = inlined_call_operand.hbm [shape: f32[2,32], index: 0, kind: input, shape index: {}]
  %s1 = inlined_call_operand.hbm [shape: f32[1,1,32], index: 1, kind: output, shape index: {0}]
  %s2 = inlined_call_operand.hbm [shape: f32[1,1,32], index: 2, kind: output, shape index: {1}]
  %3 = xla_tuple %s1, %s2
  %s4 = sld [smem:[#allocation0]]
  $region30: #{tpu_custom_call.1} parent=0
    _
  %s6 = ssub.s32 1, %s4
  %s7 = scalar_select 0, %s6, %s4
  $region1: #{tpu_custom_call.1} parent=0
    #allocation2 [shape = 'u8[1024]{0}', space=vmem, size = 0x400, scoped, tag = 'input window, operand 0, single buffered']
    #allocation3 [shape = 's32[1]{0}', space=sflag, size = 0x4, scoped, tag = 'scoped memory for tpu_custom_call.1']
    #allocation4 [shape = 's32[1]{0}', space=sflag, size = 0x4, scoped, tag = 'scoped memory for tpu_custom_call.1']
    #allocation5 [shape = 'u8[512]{0}', space=vmem, size = 0x400, scoped, tag = 'output window, operand 0, single buffered']
    #allocation6 [shape = 'u8[512]{0}', space=vmem, size = 0x400, scoped, tag = 'output window, operand 1, single buffered']
    #allocation7 [shape = 's32[1]{0}', space=sflag, size = 0x4, scoped, tag = 'scoped memory for tpu_custom_call.1']
    %8 = vsyncpa [#allocation3], 0
    %9 = vsyncpa [#allocation4], 0
    %10 = vsyncpa [#allocation7], 0
    // Predicated region
    $region2: #{tpu_custom_call.1} parent=1 // pred_check
      _
    $region3: #{tpu_custom_call.1} parent=1 // pred_check_branch
      %12 = sbr.rel (0) target = $region5
    $region4: #{tpu_custom_call.1} parent=1 // pred_region
      %s13 = sadd.s32 0, 0
      %p14 = scmp.lt.s32.totalorder %s13, 0
      %s15 = scalar_select %p14, %s13, 0
      %17 = vsyncadd [#allocation3], 0
      %s18 = smul.addr %s15, 2
      %s19 = scalar_lea.hbm %s0, %s18
      %s21 = sshll.u32 %s19, 4
      %s22 = int_to_ptr.hbm [resolvable:$true] %s21
      %s23 = sshll.u32 [#allocation2], 4
      %s24 = int_to_ptr.vmem [resolvable:$true] %s23
      %26 = dma.hbm_to_vmem [thread:$0]  %s22, 32, %s24, [#allocation3]
    $region5: #{tpu_custom_call.1} parent=1 // pred_fallthru
      _
    // Predicated region
    $region6: #{tpu_custom_call.1} parent=1 // pred_check
      _
    $region7: #{tpu_custom_call.1} parent=1 // pred_check_branch
      %28 = sbr.rel (0) target = $region9
    $region8: #{tpu_custom_call.1} parent=1 // pred_region
      %30 = dma.done [#allocation3], 32
    $region9: #{tpu_custom_call.1} parent=1 // pred_fallthru
      _
    %s31 = sadd.s32 0, 0
    %p32 = scmp.lt.s32.totalorder %s31, 0
    %s33 = scalar_select %p32, %s31, 0
    %p34 = scmp.eq.s32.totalorder 0, 0
    // Predicated region
    $region10: #{tpu_custom_call.1} parent=1 // pred_check
      %p35 = pneg %p34
    $region11: #{tpu_custom_call.1} parent=1 // pred_check_branch
      %37 = sbr.rel (%p35) target = $region13
    $region12: #{tpu_custom_call.1} parent=1 // pred_region
      %vm38 = vcmask 253952
      %39 = vst.msk [vmem:[#allocation5] sm:$0x1] %vm38, 0.0
      %40 = vst.msk [vmem:[#allocation6] sm:$0x1] %vm38, 0.0
    $region13: #{tpu_custom_call.1} parent=1 // pred_fallthru
      _
    %v41 = vld [vmem:[#allocation2] sm:$0x3]
    %v42 = vld [vmem:[#allocation5] sm:$0x1]
    %vm43 = vcmask 254976
    %v44 = vsel %vm43, %v41, 0.0
    %v45 = vrot.slane %v44, 4
    %v46 = vadd.f32 %v44, %v45
    %v47 = vrot.slane %v46, 2
    %v48 = vadd.f32 %v46, %v47
    %v49 = vrot.slane %v48, 1
    %v50 = vadd.f32 %v48, %v49
    %v51 = vadd.f32 %v42, %v50
    %vm52 = vcmask 253952
    %53 = vst.msk [vmem:[#allocation5] sm:$0x1] %vm52, %v51
    %v54 = vld [vmem:[#allocation6] sm:$0x1]
    %v55 = vmul.f32 %v41, %v41
    %v56 = vsel %vm43, %v55, 0.0
    %v57 = vrot.slane %v56, 4
    %v58 = vadd.f32 %v56, %v57
    %v59 = vrot.slane %v58, 2
    %v60 = vadd.f32 %v58, %v59
    %v61 = vrot.slane %v60, 1
    %v62 = vadd.f32 %v60, %v61
    %v63 = vadd.f32 %v54, %v62
    %64 = vst.msk [vmem:[#allocation6] sm:$0x1] %vm52, %v63
    // Predicated region
    $region14: #{tpu_custom_call.1} parent=1 // pred_check
      _
    $region15: #{tpu_custom_call.1} parent=1 // pred_check_branch
      %66 = sbr.rel (0) target = $region17
    $region16: #{tpu_custom_call.1} parent=1 // pred_region
      %68 = vsyncadd [#allocation4], 0
      %s70 = sshll.u32 [#allocation5], 4
      %s71 = int_to_ptr.vmem [resolvable:$true] %s70
      %s72 = sshll.u32 %s1, 4
      %s73 = int_to_ptr.hbm [resolvable:$true] %s72
      %75 = dma.vmem_to_hbm [thread:$0]  %s71, 16, %s73, [#allocation4]
    $region17: #{tpu_custom_call.1} parent=1 // pred_fallthru
      _
    // Predicated region
    $region18: #{tpu_custom_call.1} parent=1 // pred_check
      _
    $region19: #{tpu_custom_call.1} parent=1 // pred_check_branch
      %77 = sbr.rel (0) target = $region21
    $region20: #{tpu_custom_call.1} parent=1 // pred_region
      %79 = vsyncadd [#allocation7], 0
      %s81 = sshll.u32 [#allocation6], 4
      %s82 = int_to_ptr.vmem [resolvable:$true] %s81
      %s83 = sshll.u32 %s2, 4
      %s84 = int_to_ptr.hbm [resolvable:$true] %s83
      %86 = dma.vmem_to_hbm [thread:$0]  %s82, 16, %s84, [#allocation7]
    $region21: #{tpu_custom_call.1} parent=1 // pred_fallthru
      _
    // Predicated region
    $region22: #{tpu_custom_call.1} parent=1 // pred_check
      _
    $region23: #{tpu_custom_call.1} parent=1 // pred_check_branch
      %88 = sbr.rel (0) target = $region25
    $region24: #{tpu_custom_call.1} parent=1 // pred_region
      %90 = dma.done [#allocation4], 16
    $region25: #{tpu_custom_call.1} parent=1 // pred_fallthru
      _
    // Predicated region
    $region26: #{tpu_custom_call.1} parent=1 // pred_check
      _
    $region27: #{tpu_custom_call.1} parent=1 // pred_check_branch
      %92 = sbr.rel (0) target = $region29
    $region28: #{tpu_custom_call.1} parent=1 // pred_region
      %94 = dma.done [#allocation7], 16
    $region29: #{tpu_custom_call.1} parent=1 // pred_fallthru
      _
    %95 = vsyncpa [#allocation3], 1
    %96 = vsyncpa [#allocation4], 1
    %97 = vsyncpa [#allocation7], 1

</llo_original>
